<compile_context>
chip_gen: v6e
topology: v6e:2x2x1
jax: 0.10.0
libtpu: 0.0.40
codegen_flags: <defaults>
</compile_context>

<pallas_src>
import functools

import jax
import jax.numpy as jnp
import numpy as np
from jax.experimental import pallas as pl
from jax.experimental.pallas import tpu as pltpu

_NEG_BIG = -1e30   # finite "minus infinity": avoids inf-inf NaN in the online lse
_LANE = 128


def _lade_stats_kernel(n_ref, y_ref, t_ref, tot_ref, m_ref, s_ref, *,
                       nbps, row_ragged, exp_bf16):
    """Streams batch tiles; accumulates per-class partial stats in the outputs.

    Grid = (split p, class-tile c, batch-tile b); b is the reduction axis.
    Outputs (resident accumulators, shape (1, 8, TC) per block):
      tot_ref: sum of y over rows whose target hits the class lane
      m_ref:   running max of y over the batch (per sublane slot, per lane)
      s_ref:   rescaled sum of exp(y - m) (per sublane slot, per lane)
    """
    p = pl.program_id(0)
    c = pl.program_id(1)
    b = pl.program_id(2)

    @pl.when(b == 0)
    def _init():
        tot_ref[...] = jnp.zeros_like(tot_ref)
        s_ref[...] = jnp.zeros_like(s_ref)
        m_ref[...] = jnp.full_like(m_ref, _NEG_BIG)

    y = y_ref[...].astype(jnp.float32)                 # (TN, TC): widen per tile
    tn, tc = y.shape
    g = tn // 8

    # --- per-class hit mask: constant (1,TC) lane iota vs (TN,1) shifted target
    lane_ids = jax.lax.broadcasted_iota(jnp.int32, (1, tc), dimension=1)
    t_rel = t_ref[...] - c * tc                        # padded rows (-1) never match
    hit = lane_ids == t_rel                            # (TN, TC) broadcasted compare

    # first-term numerator: defer the cross-sublane reduce (pure VPU adds here)
    tot_ref[0] += jnp.sum(jnp.where(hit, y, 0.0).reshape(g, 8, tc), axis=0)

    # --- online logsumexp over the batch (adj hoisted to the wrapper) --------
    def lse_update(x2d):
        x3 = x2d.reshape(g, 8, tc)
        m_old = m_ref[0]                               # (8, TC)
        m_new = jnp.maximum(m_old, jnp.max(x3, axis=0))
        d = x3 - m_new
        if exp_bf16:
            e = jnp.exp(d.astype(jnp.bfloat16)).astype(jnp.float32)
        else:
            e = jnp.exp(d)
        s_ref[0] = s_ref[0] * jnp.exp(m_old - m_new) + jnp.sum(e, axis=0)
        m_ref[0] = m_new

    if row_ragged:
        start = (p * nbps + b) * tn                    # global row offset (scalar)
        n = n_ref[0]
        is_ragged_tile = start + tn > n

        @pl.when(jnp.logical_not(is_ragged_tile))
        def _full_tile():
            lse_update(y)                              # no per-element select

        @pl.when(is_ragged_tile)
        def _masked_tile():
            rows = jax.lax.broadcasted_iota(jnp.int32, (tn, 1), 0) + start
            lse_update(jnp.where(rows < n, y, _NEG_BIG))
    else:
        lse_update(y)


def lade_loss_pallas(y_pred, target, num_per_class, remine_lambda=0.1,
                     tile_rows=4096, class_tile=256, batch_splits=None,
                     use_bf16_exp=False):
    """y_pred: (N, C) float (native dtype kept), target: (N,) int, num_per_class: (C,)."""
    y_pred = jnp.asarray(y_pred)
    N, C = y_pred.shape
    target = jnp.asarray(target).astype(jnp.int32)

    # --- class tiling (lane-dense blocks; y_pred is NOT padded) --------------
    c_up = ((C + _LANE - 1) // _LANE) * _LANE
    class_tile = (max(class_tile, _LANE) // _LANE) * _LANE
    class_tile = min(class_tile, c_up)
    nc = (C + class_tile - 1) // class_tile
    c_pad = nc * class_tile

    # --- batch tiling (budget includes the lane-padded (TN,1) i32 target) ----
    itemsize = jnp.dtype(y_pred.dtype).itemsize
    bytes_per_row = class_tile * itemsize + _LANE * 4
    max_buf_bytes = 8 * 1024 * 1024                    # per pipeline buffer
    tn_cap = max(8, (max_buf_bytes // bytes_per_row) // 8 * 8)
    tn = max(8, (min(tile_rows, tn_cap) // 8) * 8)
    tn = min(tn, ((N + 7) // 8) * 8)
    nb_total = (N + tn - 1) // tn
    n_pad = nb_total * tn
    row_ragged = n_pad != N

    # Batch-split "parallel" axis: keeps both v7x TensorCores busy when C<=TC.
    if batch_splits is None:
        batch_splits = 2 if (nc == 1 and nb_total >= 4 and nb_total % 2 == 0) else 1
    nsplit = int(batch_splits)
    if nsplit < 1 or nb_total % nsplit != 0:
        nsplit = 1
    nbps = nb_total // nsplit

    # Only the tiny per-row vector is padded (-1 never matches a class lane).
    t_p = jnp.pad(target, (0, n_pad - N), constant_values=-1).reshape(n_pad, 1)
    n_scalar = jnp.array([N], jnp.int32)               # SMEM scalar (prefetched)

    kernel = functools.partial(_lade_stats_kernel, nbps=nbps,
                               row_ragged=row_ragged, exp_bf16=use_bf16_exp)

    # VMEM: double-buffered y+target tiles, resident output accumulators, slack.
    est_vmem = (2 * tn * bytes_per_row + 2 * 3 * 8 * class_tile * 4 + (4 << 20))
    try:
        vmem_cap = int(pltpu.get_tpu_info().vmem_capacity_bytes)
    except Exception:
        vmem_cap = 64 * 1024 * 1024                    # conservative (v7x per-TC)
    vmem_limit = int(min(3 * vmem_cap // 4, max(32 * 1024 * 1024, est_vmem)))

    out_sds = jax.ShapeDtypeStruct((nsplit, 8, c_pad), jnp.float32)
    part_spec = pl.BlockSpec((1, 8, class_tile), lambda p, c, b, n: (p, 0, c))

    tot_p, m_p, s_p = pl.pallas_call(
        kernel,
        out_shape=(out_sds, out_sds, out_sds),
        grid_spec=pltpu.PrefetchScalarGridSpec(
            num_scalar_prefetch=1,
            grid=(nsplit, nc, nbps),
            in_specs=[
                pl.BlockSpec((tn, class_tile), lambda p, c, b, n: (p * nbps + b, c)),
                pl.BlockSpec((tn, 1), lambda p, c, b, n: (p * nbps + b, 0)),
            ],
            out_specs=[part_spec, part_spec, part_spec],
        ),
        compiler_params=pltpu.CompilerParams(
            dimension_semantics=("parallel", "parallel", "arbitrary"),
            vmem_limit_bytes=vmem_limit),
    )(n_scalar, y_pred, t_p)

    # --- tiny O(C) epilogue in the wrapper ------------------------------------
    num_per_class = jnp.asarray(num_per_class, jnp.float32)
    prior = num_per_class / jnp.sum(num_per_class)
    adj = -jnp.log(prior + 1e-9) + jnp.log(jnp.float32(1.0 / C) + 1e-9)
    cnt = jnp.zeros((C,), jnp.float32).at[target].add(1.0)   # counts from target only

    # Slice away padded class lanes BEFORE any log/exp (they may hold garbage),
    # then combine partials over (split, sublane slot).
    tot = jnp.sum(tot_p[..., :C], axis=(0, 1))
    m_g = jnp.max(m_p[..., :C], axis=(0, 1))
    s_g = jnp.sum(s_p[..., :C] * jnp.exp(m_p[..., :C] - m_g), axis=(0, 1))

    first = tot / (cnt + 1e-8)
    second = m_g + jnp.log(s_g) + adj - jnp.log(jnp.float32(N))   # adj hoisted
    estim = first - second - jnp.float32(remine_lambda) * second * second
    return -jnp.sum(estim * prior)                       # cls_weight == prior


def lade_loss_ref(y_pred, target, num_per_class, remine_lambda=0.1):
    """Pure-JAX reference mirroring the PyTorch forward, for verification."""
    N, C = y_pred.shape
    y_pred = jnp.asarray(y_pred, jnp.float32)
    num_per_class = jnp.asarray(num_per_class, jnp.float32)
    prior = num_per_class / jnp.sum(num_per_class)
    balanced_prior = jnp.float32(1.0 / C)
    cls_weight = prior

    mask = (target[None, :] == jnp.arange(C)[:, None]).astype(jnp.float32)   # (C, N)
    per_cls_pred_spread = y_pred.T * mask                                     # (C, N)
    pred_spread = (y_pred - jnp.log(prior + 1e-9) + jnp.log(balanced_prior + 1e-9)).T
    num_samples_per_cls = jnp.sum(mask, axis=-1)                              # (C,)

    first = jnp.sum(per_cls_pred_spread, -1) / (num_samples_per_cls + 1e-8)
    second = jax.scipy.special.logsumexp(pred_spread, axis=-1) - jnp.log(jnp.float32(N))
    estim = (first - second) - second ** 2 * remine_lambda
    return -jnp.sum(estim * cls_weight)


if __name__ == "__main__":
    key = jax.random.PRNGKey(0)
    C = 10
    num_per_class = [50, 40, 30, 25, 20, 15, 12, 10, 8, 5]
    k1, k2, k3, k4 = jax.random.split(key, 4)

    N = 20
    y = jax.random.normal(k1, (N, C), dtype=jnp.float32)
    t = jax.random.randint(k2, (N,), 0, C, dtype=jnp.int32)
    ref = jax.block_until_ready(lade_loss_ref(y, t, num_per_class))

    # 1) Single batch tile; exercises ragged rows (20 % 24) and ragged class lanes.
    l1 = jax.block_until_ready(lade_loss_pallas(y, t, num_per_class))
    np.testing.assert_allclose(np.asarray(l1), np.asarray(ref), rtol=1e-5, atol=1e-5)

    # 2) Several batch tiles: streaming online-logsumexp accumulation.
    l2 = jax.block_until_ready(lade_loss_pallas(y, t, num_per_class, tile_rows=8))
    np.testing.assert_allclose(np.asarray(l2), np.asarray(ref), rtol=1e-5, atol=1e-5)

    # 3) Explicit 2-way batch split (v7x dual-TensorCore path) + ragged last tile.
    N3 = 44
    y3 = jax.random.normal(k3, (N3, C), dtype=jnp.float32)
    t3 = jax.random.randint(k4, (N3,), 0, C, dtype=jnp.int32)
    ref3 = jax.block_until_ready(lade_loss_ref(y3, t3, num_per_class))
    l3 = jax.block_until_ready(
        lade_loss_pallas(y3, t3, num_per_class, tile_rows=8, batch_splits=2))
    np.testing.assert_allclose(np.asarray(l3), np.asarray(ref3), rtol=1e-5, atol=1e-5)

    # 4) Native bf16 input (no wrapper upcast; widened per tile in-kernel).
    y_bf16 = y.astype(jnp.bfloat16)
    ref_bf16 = jax.block_until_ready(
        lade_loss_ref(y_bf16.astype(jnp.float32), t, num_per_class))
    l4 = jax.block_until_ready(lade_loss_pallas(y_bf16, t, num_per_class, tile_rows=8))
    np.testing.assert_allclose(np.asarray(l4), np.asarray(ref_bf16), rtol=1e-4, atol=1e-4)

    # 5) Opt-in bf16 exp (v6e/v7x EUP fast path) — loose tolerance by design.
    l5 = jax.block_until_ready(lade_loss_pallas(y, t, num_per_class, use_bf16_exp=True))
    np.testing.assert_allclose(np.asarray(l5), np.asarray(ref), rtol=0, atol=5e-2)

    print("KERNEL_OK")
</pallas_src>

<mosaic_0001>
module attributes {stable_mosaic.version = 11 : i64} {
  func.func @_lade_stats_kernel(%arg0: i32, %arg1: i32, %arg2: i32, %arg3: memref<1xi32, #tpu.memory_space<smem>>, %arg4: memref<24x128xf32, #tpu.memory_space<vmem>>, %arg5: memref<24x1xi32, #tpu.memory_space<vmem>>, %arg6: memref<1x8x128xf32, #tpu.memory_space<vmem>>, %arg7: memref<1x8x128xf32, #tpu.memory_space<vmem>>, %arg8: memref<1x8x128xf32, #tpu.memory_space<vmem>>) attributes {dimension_semantics = [#tpu.dimension_semantics<parallel>, #tpu.dimension_semantics<parallel>, #tpu.dimension_semantics<arbitrary>], iteration_bounds = array<i64: 1, 1, 1>, scalar_prefetch = 1 : i64, scratch_operands = 0 : i64, tpu.core_type = #tpu.core_type<tc>, window_params = [{transform_indices = @transform_0, window_bounds = array<i64: 24, 128>}, {transform_indices = @transform_1, window_bounds = array<i64: 24, 1>}, {transform_indices = @transform_2, window_bounds = array<i64: 1, 8, 128>}, {transform_indices = @transform_3, window_bounds = array<i64: 1, 8, 128>}, {transform_indices = @transform_4, window_bounds = array<i64: 1, 8, 128>}]} {
    %c0_i32 = arith.constant 0 : i32
    %0 = arith.cmpi eq, %arg2, %c0_i32 : i32
    %1 = arith.extui %0 : i1 to i32
    %c0_i32_0 = arith.constant 0 : i32
    %2 = arith.cmpi ne, %1, %c0_i32_0 : i32
    scf.if %2 {
      %cst_15 = arith.constant 0.000000e+00 : f32
      %33 = vector.broadcast %cst_15 : f32 to vector<1x8x128xf32>
      %c0_16 = arith.constant 0 : index
      %c0_17 = arith.constant 0 : index
      %c0_18 = arith.constant 0 : index
      %34 = vector.load %arg6[%c0_16, %c0_17, %c0_18] : memref<1x8x128xf32, #tpu.memory_space<vmem>>, vector<1x8x128xf32>
      tpu.vector_store %arg6[%c0_16, %c0_17, %c0_18], %33 {strides = array<i32>} : memref<1x8x128xf32, #tpu.memory_space<vmem>>, vector<1x8x128xf32>,
      %cst_19 = arith.constant 0.000000e+00 : f32
      %35 = vector.broadcast %cst_19 : f32 to vector<1x8x128xf32>
      %c0_20 = arith.constant 0 : index
      %c0_21 = arith.constant 0 : index
      %c0_22 = arith.constant 0 : index
      %36 = vector.load %arg8[%c0_20, %c0_21, %c0_22] : memref<1x8x128xf32, #tpu.memory_space<vmem>>, vector<1x8x128xf32>
      tpu.vector_store %arg8[%c0_20, %c0_21, %c0_22], %35 {strides = array<i32>} : memref<1x8x128xf32, #tpu.memory_space<vmem>>, vector<1x8x128xf32>,
      %cst_23 = arith.constant -1.000000e+30 : f32
      %37 = vector.broadcast %cst_23 : f32 to vector<1x8x128xf32>
      %c0_24 = arith.constant 0 : index
      %c0_25 = arith.constant 0 : index
      %c0_26 = arith.constant 0 : index
      %38 = vector.load %arg7[%c0_24, %c0_25, %c0_26] : memref<1x8x128xf32, #tpu.memory_space<vmem>>, vector<1x8x128xf32>
      tpu.vector_store %arg7[%c0_24, %c0_25, %c0_26], %37 {strides = array<i32>} : memref<1x8x128xf32, #tpu.memory_space<vmem>>, vector<1x8x128xf32>,
    } else {
    }
    %c0 = arith.constant 0 : index
    %c0_1 = arith.constant 0 : index
    %3 = vector.load %arg4[%c0, %c0_1] : memref<24x128xf32, #tpu.memory_space<vmem>>, vector<24x128xf32>
    %4 = tpu.iota {dimensions = array<i32: 1>} : vector<1x128xi32>
    %c0_2 = arith.constant 0 : index
    %c0_3 = arith.constant 0 : index
    %5 = vector.load %arg5[%c0_2, %c0_3] : memref<24x1xi32, #tpu.memory_space<vmem>>, vector<24x1xi32>
    %c128_i32 = arith.constant 128 : i32
    %6 = arith.muli %arg1, %c128_i32 : i32
    %7 = vector.broadcast %6 : i32 to vector<24x1xi32>
    %8 = arith.subi %5, %7 : vector<24x1xi32>
    %9 = vector.broadcast %4 : vector<1x128xi32> to vector<24x128xi32>
    %10 = vector.broadcast %8 : vector<24x1xi32> to vector<24x128xi32>
    %11 = arith.cmpi eq, %9, %10 : vector<24x128xi32>
    %c0_4 = arith.constant 0 : index
    %c0_5 = arith.constant 0 : index
    %c0_6 = arith.constant 0 : index
    %12 = vector.load %arg6[%c0_4, %c0_5, %c0_6] : memref<1x8x128xf32, #tpu.memory_space<vmem>>, vector<1x8x128xf32>
    %13 = vector.shape_cast %12 : vector<1x8x128xf32> to vector<8x128xf32>
    %cst = arith.constant 0.000000e+00 : f32
    %14 = vector.broadcast %cst : f32 to vector<24x128xf32>
    %15 = arith.select %11, %3, %14 : vector<24x128xi1>, vector<24x128xf32>
    %16 = vector.shape_cast %15 : vector<24x128xf32> to vector<3x8x128xf32>
    %cst_7 = arith.constant dense<0.000000e+00> : vector<8x128xf32>
    %17 = vector.multi_reduction <add>, %16, %cst_7 [0] : vector<3x8x128xf32> to vector<8x128xf32>
    %18 = arith.addf %13, %17 : vector<8x128xf32>
    %c0_8 = arith.constant 0 : index
    %c0_9 = arith.constant 0 : index
    %c0_10 = arith.constant 0 : index
    %19 = vector.load %arg6[%c0_8, %c0_9, %c0_10] : memref<1x8x128xf32, #tpu.memory_space<vmem>>, vector<1x8x128xf32>
    %20 = vector.shape_cast %19 : vector<1x8x128xf32> to vector<8x128xf32>
    %21 = vector.shape_cast %18 : vector<8x128xf32> to vector<1x8x128xf32>
    tpu.vector_store %arg6[%c0_8, %c0_9, %c0_10], %21 {strides = array<i32>} : memref<1x8x128xf32, #tpu.memory_space<vmem>>, vector<1x8x128xf32>,
    %c1_i32 = arith.constant 1 : i32
    %22 = arith.muli %arg0, %c1_i32 : i32
    %23 = arith.addi %22, %arg2 : i32
    %c24_i32 = arith.constant 24 : i32
    %24 = arith.muli %23, %c24_i32 : i32
    %c0_11 = arith.constant 0 : index
    %25 = memref.load %arg3[%c0_11] : memref<1xi32, #tpu.memory_space<smem>>
    %c24_i32_12 = arith.constant 24 : i32
    %26 = arith.addi %24, %c24_i32_12 : i32
    %27 = arith.cmpi sgt, %26, %25 : i32
    %true = arith.constant true
    %28 = arith.xori %27, %true : i1
    %29 = arith.extui %28 : i1 to i32
    %c0_i32_13 = arith.constant 0 : i32
    %30 = arith.cmpi ne, %29, %c0_i32_13 : i32
    scf.if %30 {
      %33 = vector.shape_cast %3 : vector<24x128xf32> to vector<3x8x128xf32>
      %c0_15 = arith.constant 0 : index
      %c0_16 = arith.constant 0 : index
      %c0_17 = arith.constant 0 : index
      %34 = vector.load %arg7[%c0_15, %c0_16, %c0_17] : memref<1x8x128xf32, #tpu.memory_space<vmem>>, vector<1x8x128xf32>
      %35 = vector.shape_cast %34 : vector<1x8x128xf32> to vector<8x128xf32>
      %cst_18 = arith.constant dense<0xFF800000> : vector<8x128xf32>
      %36 = vector.multi_reduction <maximumf>, %33, %cst_18 [0] : vector<3x8x128xf32> to vector<8x128xf32>
      %37 = arith.maximumf %35, %36 : vector<8x128xf32>
      %38 = vector.shape_cast %37 : vector<8x128xf32> to vector<1x8x128xf32>
      %39 = vector.broadcast %38 : vector<1x8x128xf32> to vector<3x8x128xf32>
      %40 = arith.subf %33, %39 : vector<3x8x128xf32>
      %41 = math.exp %40 : vector<3x8x128xf32>
      %c0_19 = arith.constant 0 : index
      %c0_20 = arith.constant 0 : index
      %c0_21 = arith.constant 0 : index
      %42 = vector.load %arg8[%c0_19, %c0_20, %c0_21] : memref<1x8x128xf32, #tpu.memory_space<vmem>>, vector<1x8x128xf32>
      %43 = vector.shape_cast %42 : vector<1x8x128xf32> to vector<8x128xf32>
      %44 = arith.subf %35, %37 : vector<8x128xf32>
      %45 = math.exp %44 : vector<8x128xf32>
      %46 = arith.mulf %43, %45 : vector<8x128xf32>
      %cst_22 = arith.constant dense<0.000000e+00> : vector<8x128xf32>
      %47 = vector.multi_reduction <add>, %41, %cst_22 [0] : vector<3x8x128xf32> to vector<8x128xf32>
      %48 = arith.addf %46, %47 : vector<8x128xf32>
      %c0_23 = arith.constant 0 : index
      %c0_24 = arith.constant 0 : index
      %c0_25 = arith.constant 0 : index
      %49 = vector.load %arg8[%c0_23, %c0_24, %c0_25] : memref<1x8x128xf32, #tpu.memory_space<vmem>>, vector<1x8x128xf32>
      %50 = vector.shape_cast %49 : vector<1x8x128xf32> to vector<8x128xf32>
      %51 = vector.shape_cast %48 : vector<8x128xf32> to vector<1x8x128xf32>
      tpu.vector_store %arg8[%c0_23, %c0_24, %c0_25], %51 {strides = array<i32>} : memref<1x8x128xf32, #tpu.memory_space<vmem>>, vector<1x8x128xf32>,
      %c0_26 = arith.constant 0 : index
      %c0_27 = arith.constant 0 : index
      %c0_28 = arith.constant 0 : index
      %52 = vector.load %arg7[%c0_26, %c0_27, %c0_28] : memref<1x8x128xf32, #tpu.memory_space<vmem>>, vector<1x8x128xf32>
      %53 = vector.shape_cast %52 : vector<1x8x128xf32> to vector<8x128xf32>
      %54 = vector.shape_cast %37 : vector<8x128xf32> to vector<1x8x128xf32>
      tpu.vector_store %arg7[%c0_26, %c0_27, %c0_28], %54 {strides = array<i32>} : memref<1x8x128xf32, #tpu.memory_space<vmem>>, vector<1x8x128xf32>,
    } else {
    }
    %31 = arith.extui %27 : i1 to i32
    %c0_i32_14 = arith.constant 0 : i32
    %32 = arith.cmpi ne, %31, %c0_i32_14 : i32
    scf.if %32 {
      %33 = tpu.iota {dimensions = array<i32: 0>} : vector<24x1xi32>
      %34 = vector.broadcast %24 : i32 to vector<24x1xi32>
      %35 = arith.addi %33, %34 : vector<24x1xi32>
      %36 = vector.broadcast %25 : i32 to vector<24x1xi32>
      %37 = arith.cmpi slt, %35, %36 : vector<24x1xi32>
      %cst_15 = arith.constant -1.000000e+30 : f32
      %38 = vector.shape_cast %37 : vector<24x1xi1> to vector<24x1xi1>
      %39 = vector.broadcast %38 : vector<24x1xi1> to vector<24x128xi1>
      %40 = vector.broadcast %cst_15 : f32 to vector<24x128xf32>
      %41 = arith.select %39, %3, %40 : vector<24x128xi1>, vector<24x128xf32>
      %42 = vector.shape_cast %41 : vector<24x128xf32> to vector<3x8x128xf32>
      %c0_16 = arith.constant 0 : index
      %c0_17 = arith.constant 0 : index
      %c0_18 = arith.constant 0 : index
      %43 = vector.load %arg7[%c0_16, %c0_17, %c0_18] : memref<1x8x128xf32, #tpu.memory_space<vmem>>, vector<1x8x128xf32>
      %44 = vector.shape_cast %43 : vector<1x8x128xf32> to vector<8x128xf32>
      %cst_19 = arith.constant dense<0xFF800000> : vector<8x128xf32>
      %45 = vector.multi_reduction <maximumf>, %42, %cst_19 [0] : vector<3x8x128xf32> to vector<8x128xf32>
      %46 = arith.maximumf %44, %45 : vector<8x128xf32>
      %47 = vector.shape_cast %46 : vector<8x128xf32> to vector<1x8x128xf32>
      %48 = vector.broadcast %47 : vector<1x8x128xf32> to vector<3x8x128xf32>
      %49 = arith.subf %42, %48 : vector<3x8x128xf32>
      %50 = math.exp %49 : vector<3x8x128xf32>
      %c0_20 = arith.constant 0 : index
      %c0_21 = arith.constant 0 : index
      %c0_22 = arith.constant 0 : index
      %51 = vector.load %arg8[%c0_20, %c0_21, %c0_22] : memref<1x8x128xf32, #tpu.memory_space<vmem>>, vector<1x8x128xf32>
      %52 = vector.shape_cast %51 : vector<1x8x128xf32> to vector<8x128xf32>
      %53 = arith.subf %44, %46 : vector<8x128xf32>
      %54 = math.exp %53 : vector<8x128xf32>
      %55 = arith.mulf %52, %54 : vector<8x128xf32>
      %cst_23 = arith.constant dense<0.000000e+00> : vector<8x128xf32>
      %56 = vector.multi_reduction <add>, %50, %cst_23 [0] : vector<3x8x128xf32> to vector<8x128xf32>
      %57 = arith.addf %55, %56 : vector<8x128xf32>
      %c0_24 = arith.constant 0 : index
      %c0_25 = arith.constant 0 : index
      %c0_26 = arith.constant 0 : index
      %58 = vector.load %arg8[%c0_24, %c0_25, %c0_26] : memref<1x8x128xf32, #tpu.memory_space<vmem>>, vector<1x8x128xf32>
      %59 = vector.shape_cast %58 : vector<1x8x128xf32> to vector<8x128xf32>
      %60 = vector.shape_cast %57 : vector<8x128xf32> to vector<1x8x128xf32>
      tpu.vector_store %arg8[%c0_24, %c0_25, %c0_26], %60 {strides = array<i32>} : memref<1x8x128xf32, #tpu.memory_space<vmem>>, vector<1x8x128xf32>,
      %c0_27 = arith.constant 0 : index
      %c0_28 = arith.constant 0 : index
      %c0_29 = arith.constant 0 : index
      %61 = vector.load %arg7[%c0_27, %c0_28, %c0_29] : memref<1x8x128xf32, #tpu.memory_space<vmem>>, vector<1x8x128xf32>
      %62 = vector.shape_cast %61 : vector<1x8x128xf32> to vector<8x128xf32>
      %63 = vector.shape_cast %46 : vector<8x128xf32> to vector<1x8x128xf32>
      tpu.vector_store %arg7[%c0_27, %c0_28, %c0_29], %63 {strides = array<i32>} : memref<1x8x128xf32, #tpu.memory_space<vmem>>, vector<1x8x128xf32>,
    } else {
    }
    return
  }
  func.func @transform_0(%arg0: i32, %arg1: i32, %arg2: i32, %arg3: memref<1xi32, #tpu.memory_space<smem>>) -> (i32, i32) {
    %c1_i32 = arith.constant 1 : i32
    %0 = arith.muli %arg0, %c1_i32 : i32
    %1 = arith.addi %0, %arg2 : i32
    %c0_i32 = arith.constant 0 : i32
    return %1, %arg1 : i32, i32
  }
  func.func @transform_1(%arg0: i32, %arg1: i32, %arg2: i32, %arg3: memref<1xi32, #tpu.memory_space<smem>>) -> (i32, i32) {
    %c1_i32 = arith.constant 1 : i32
    %0 = arith.muli %arg0, %c1_i32 : i32
    %1 = arith.addi %0, %arg2 : i32
    %c0_i32 = arith.constant 0 : i32
    %c0_i32_0 = arith.constant 0 : i32
    return %1, %c0_i32 : i32, i32
  }
  func.func @transform_2(%arg0: i32, %arg1: i32, %arg2: i32, %arg3: memref<1xi32, #tpu.memory_space<smem>>) -> (i32, i32, i32) {
    %c0_i32 = arith.constant 0 : i32
    %c0_i32_0 = arith.constant 0 : i32
    return %arg0, %c0_i32, %arg1 : i32, i32, i32
  }
  func.func @transform_3(%arg0: i32, %arg1: i32, %arg2: i32, %arg3: memref<1xi32, #tpu.memory_space<smem>>) -> (i32, i32, i32) {
    %c0_i32 = arith.constant 0 : i32
    %c0_i32_0 = arith.constant 0 : i32
    return %arg0, %c0_i32, %arg1 : i32, i32, i32
  }
  func.func @transform_4(%arg0: i32, %arg1: i32, %arg2: i32, %arg3: memref<1xi32, #tpu.memory_space<smem>>) -> (i32, i32, i32) {
    %c0_i32 = arith.constant 0 : i32
    %c0_i32_0 = arith.constant 0 : i32
    return %arg0, %c0_i32, %arg1 : i32, i32, i32
  }
}

</mosaic_0001>

<llo_original>
// kernel: tpu_custom_call.1
$region0: #{tpu_custom_call.1}
  #allocation0 [shape = 'u32[]', space=smem, size = 0x4, offset = 0x4, fixed_abs, tag = 'smem constant byte address 0x4 - core index']
  #allocation1 [shape = 'u32[144,128]{1,0:T(1,128)}', space=vmem, size = 0x12000, scoped, tag = 'internal scratch']
  #allocation2 [shape = 's32[1]{0}', space=sflag, size = 0x4, scoped, tag = 'scoped memory for tpu_custom_call.1']
  #allocation3 [shape = 's32[1]{0:T(128)S(6)}', space=smem, size = 0x200, scoped, tag = 'prefetched SMEM operand 0']
  %s0 = inlined_call_operand.<no memory space> [shape: s32[1], index: 0, kind: input, shape index: {}]
  %s1 = inlined_call_operand.vmem [shape: f32[20,10], index: 1, kind: input, shape index: {}]
  %s2 = inlined_call_operand.vmem [shape: s32[24,1], index: 2, kind: input, shape index: {}]
  %s3 = inlined_call_operand.hbm [shape: f32[1,8,128], index: 3, kind: output, shape index: {0}]
  %s4 = inlined_call_operand.hbm [shape: f32[1,8,128], index: 4, kind: output, shape index: {1}]
  %s5 = inlined_call_operand.hbm [shape: f32[1,8,128], index: 5, kind: output, shape index: {2}]
  %6 = xla_tuple %s3, %s4, %s5
  %s7 = sld [smem:[#allocation0]]
  $region46: #{tpu_custom_call.1} parent=0
    _
  %s9 = ssub.s32 1, %s7
  %s10 = scalar_select 0, %s9, %s7
  %11 = sst [smem:[#allocation3]] %s0
  $region1: #{tpu_custom_call.1} parent=0
    #allocation4 [shape = 'u8[4096]{0}', space=vmem, size = 0x1000, scoped, tag = 'output window, operand 0, single buffered']
    #allocation5 [shape = 's32[1]{0}', space=sflag, size = 0x4, scoped, tag = 'scoped memory for tpu_custom_call.1']
    #allocation6 [shape = 'u8[4096]{0}', space=vmem, size = 0x1000, scoped, tag = 'output window, operand 1, single buffered']
    #allocation7 [shape = 's32[1]{0}', space=sflag, size = 0x4, scoped, tag = 'scoped memory for tpu_custom_call.1']
    #allocation8 [shape = 'u8[4096]{0}', space=vmem, size = 0x1000, scoped, tag = 'output window, operand 2, single buffered']
    %12 = vsyncpa [#allocation5], 0
    %13 = vsyncpa [#allocation7], 0
    // Predicated region
    $region2: #{tpu_custom_call.1} parent=1 // pred_check
      _
    $region3: #{tpu_custom_call.1} parent=1 // pred_check_branch
      %15 = sbr.rel (0) target = $region5
    $region4: #{tpu_custom_call.1} parent=1 // pred_region
      %s16 = sadd.s32 0, 0
      %s17 = smul.u32 3, %s16
      %p18 = scmp.lt.s32.totalorder %s17, 2
      %s19 = scalar_select %p18, %s17, 2
      %s20 = smul.addr %s19, 8
      %s21 = scalar_lea.vmem %s1, %s20
      %s22 = sadd.s32 0, 0
      %s23 = smul.u32 3, %s22
    $region5: #{tpu_custom_call.1} parent=1 // pred_fallthru
      _
    // Predicated region
    $region6: #{tpu_custom_call.1} parent=1 // pred_check
      _
    $region7: #{tpu_custom_call.1} parent=1 // pred_check_branch
      %25 = sbr.rel (0) target = $region9
    $region8: #{tpu_custom_call.1} parent=1 // pred_region
      %s26 = sadd.s32 0, 0
      %s27 = smul.u32 3, %s26
      %p28 = scmp.lt.s32.totalorder %s27, 2
      %s29 = scalar_select %p28, %s27, 2
      %s30 = smul.addr %s29, 8
      %s31 = scalar_lea.vmem %s2, %s30
      %s32 = sadd.s32 0, 0
      %s33 = smul.u32 3, %s32
    $region9: #{tpu_custom_call.1} parent=1 // pred_fallthru
      _
    %s34 = sadd.s32 0, 0
    %s35 = smul.u32 3, %s34
    %p36 = scmp.lt.s32.totalorder %s35, 2
    %s37 = scalar_select %p36, %s35, 2
    %s38 = smul.addr %s37, 8
    %s39 = scalar_lea.vmem %s1, %s38
    %s40 = sadd.s32 0, 0
    %s41 = smul.u32 3, %s40
    %p42 = scmp.lt.s32.totalorder %s41, 2
    %s43 = scalar_select %p42, %s41, 2
    %s44 = smul.addr %s43, 8
    %s45 = scalar_lea.vmem %s2, %s44
    %s46 = sadd.s32 0, 0
    %s47 = smul.u32 3, %s46
    %p48 = scmp.lt.s32.totalorder %s47, 2
    %s49 = scalar_select %p48, %s47, 2
    %s50 = smul.addr %s49, 8
    %s51 = scalar_lea.vmem %s1, %s50
    %s52 = sadd.s32 0, 0
    %s53 = smul.u32 3, %s52
    %s54 = sadd.s32 0, 0
    %s55 = smul.u32 3, %s54
    %p56 = scmp.lt.s32.totalorder %s55, 2
    %s57 = scalar_select %p56, %s55, 2
    %s58 = smul.addr %s57, 8
    %s59 = scalar_lea.vmem %s2, %s58
    %s60 = sadd.s32 0, 0
    %s61 = smul.u32 3, %s60
    %p62 = scmp.eq.s32.totalorder 0, 0
    // Predicated region
    $region10: #{tpu_custom_call.1} parent=1 // pred_check
      %p63 = pneg %p62
    $region11: #{tpu_custom_call.1} parent=1 // pred_check_branch
      %65 = sbr.rel (%p63) target = $region13
    $region12: #{tpu_custom_call.1} parent=1 // pred_region
      %66 = vst [vmem:[#allocation4] sm:$0xff] 0.0
      %67 = vst [vmem:[#allocation8] sm:$0xff] 0.0
      %68 = vst [vmem:[#allocation6] sm:$0xff] -1e+30
    $region13: #{tpu_custom_call.1} parent=1 // pred_fallthru
      _
    %v69 = vld [vmem:[%s51] sm:$0xff]
    %v70 = vld [vmem:[%s51 + $0x8] sm:$0xff]
    %v71 = vld [vmem:[%s51 + $0x10] sm:$0xff]
    %v72 = vlaneseq
    %v73 = vand.u32 %v72, 127
    %v74 = vld [vmem:[%s59] sm:$0xff]
    %v75 = vld [vmem:[%s59 + $0x8] sm:$0xff]
    %v76 = vld [vmem:[%s59 + $0x10] sm:$0xff]
    %s77 = smul.u32 0, 128
    %v78 = vstv %s77
    %v79 = vsub.s32 %v74, %v78
    %v80 = vsub.s32 %v75, %v78
    %v81 = vsub.s32 %v76, %v78
    %82 = vset.pattern.permute.xlu0 0
    %83 = vperm.xlu0 %82, %v79
    %v84 = vpop.permute.xlu0 %83
    %85 = vset.pattern.permute.xlu0 0
    %86 = vperm.xlu0 %85, %v80
    %v87 = vpop.permute.xlu0 %86
    %88 = vset.pattern.permute.xlu0 0
    %89 = vperm.xlu0 %88, %v81
    %v90 = vpop.permute.xlu0 %89
    %vm91 = vcmp.eq.s32.totalorder %v73, %v84
    %vm92 = vcmp.eq.s32.totalorder %v73, %v87
    %vm93 = vcmp.eq.s32.totalorder %v73, %v90
    %v94 = vld [vmem:[#allocation4] sm:$0xff]
    %v95 = vsel %vm91, %v69, 0.0
    %v96 = vsel %vm92, %v70, 0.0
    %v97 = vsel %vm93, %v71, 0.0
    %v98 = vadd.f32 %v95, %v96
    %v99 = vadd.f32 %v98, %v97
    %v100 = vadd.f32 %v94, %v99
    %101 = vst [vmem:[#allocation4] sm:$0xff] %v100
    %s102 = sadd.s32 0, 0
    %s103 = smul.u32 %s102, 24
    %s104 = sld [smem:[#allocation3]]
    %s105 = sadd.s32 %s103, 24
    %p106 = scmp.gt.s32.totalorder %s105, %s104
    %p107 = scmp.le.s32.totalorder %s105, %s104
    // Predicated region
    $region14: #{tpu_custom_call.1} parent=1 // pred_check
      %p108 = pneg %p107
    $region15: #{tpu_custom_call.1} parent=1 // pred_check_branch
      %110 = sbr.rel (%p108) target = $region17
    $region16: #{tpu_custom_call.1} parent=1 // pred_region
      %v111 = vld [vmem:[#allocation6] sm:$0xff]
      %v112 = vmax.f32 %v69, %v70
      %v113 = vmax.f32 %v112, %v71
      %v114 = vmax.f32 %v111, %v113
      %v115 = vsub.f32 %v69, %v114
      %v116 = vsub.f32 %v70, %v114
      %v117 = vsub.f32 %v71, %v114
      %v118 = vmul.f32 %v115, 1.442695
      %v119 = vpow.pop %v118
      %v120 = vmul.f32 %v116, 1.442695
      %v121 = vpow.pop %v120
      %v122 = vmul.f32 %v117, 1.442695
      %v123 = vpow.pop %v122
      %v124 = vld [vmem:[#allocation8] sm:$0xff]
      %v125 = vsub.f32 %v111, %v114
      %v126 = vmul.f32 %v125, 1.442695
      %v127 = vpow.pop %v126
      %v128 = vmul.f32 %v124, %v127
      %v129 = vadd.f32 %v119, %v121
      %v130 = vadd.f32 %v129, %v123
      %v131 = vadd.f32 %v128, %v130
      %132 = vst [vmem:[#allocation8] sm:$0xff] %v131
      %133 = vst [vmem:[#allocation6] sm:$0xff] %v114
    $region17: #{tpu_custom_call.1} parent=1 // pred_fallthru
      _
    // Predicated region
    $region18: #{tpu_custom_call.1} parent=1 // pred_check
      %p134 = pneg %p106
    $region19: #{tpu_custom_call.1} parent=1 // pred_check_branch
      %136 = sbr.rel (%p134) target = $region21
    $region20: #{tpu_custom_call.1} parent=1 // pred_region
      %v137 = vlaneseq
      %v138 = vshrl.u32 %v137, 7
      %v139 = vadd.s32 %v138, 8
      %v140 = vadd.s32 %v138, 16
      %v141 = vstv %s103
      %v142 = vadd.s32 %v138, %v141
      %v143 = vadd.s32 %v139, %v141
      %v144 = vadd.s32 %v140, %v141
      %v145 = vstv %s104
      %vm146 = vcmp.lt.s32.totalorder %v142, %v145
      %vm147 = vcmp.lt.s32.totalorder %v143, %v145
      %vm148 = vcmp.lt.s32.totalorder %v144, %v145
      %v149 = vsel %vm146, 1, 0
      %v150 = vsel %vm147, 1, 0
      %v151 = vsel %vm148, 1, 0
      %vm152 = vcmp.eq.s32.totalorder %v149, 1
      %vm153 = vcmp.eq.s32.totalorder %v150, 1
      %vm154 = vcmp.eq.s32.totalorder %v151, 1
      %v155 = vsel %vm152, %v69, -1e+30
      %v156 = vsel %vm153, %v70, -1e+30
      %v157 = vsel %vm154, %v71, -1e+30
      %v158 = vld [vmem:[#allocation6] sm:$0xff]
      %v159 = vmax.f32 %v155, %v156
      %v160 = vmax.f32 %v159, %v157
      %v161 = vmax.f32 %v158, %v160
      %v162 = vsub.f32 %v155, %v161
      %v163 = vsub.f32 %v156, %v161
      %v164 = vsub.f32 %v157, %v161
      %v165 = vmul.f32 %v162, 1.442695
      %v166 = vpow.pop %v165
      %v167 = vmul.f32 %v163, 1.442695
      %v168 = vpow.pop %v167
      %v169 = vmul.f32 %v164, 1.442695
      %v170 = vpow.pop %v169
      %v171 = vld [vmem:[#allocation8] sm:$0xff]
      %v172 = vsub.f32 %v158, %v161
      %v173 = vmul.f32 %v172, 1.442695
      %v174 = vpow.pop %v173
      %v175 = vmul.f32 %v171, %v174
      %v176 = vadd.f32 %v166, %v168
      %v177 = vadd.f32 %v176, %v170
      %v178 = vadd.f32 %v175, %v177
      %179 = vst [vmem:[#allocation8] sm:$0xff] %v178
      %180 = vst [vmem:[#allocation6] sm:$0xff] %v161
    $region21: #{tpu_custom_call.1} parent=1 // pred_fallthru
      _
    // Predicated region
    $region22: #{tpu_custom_call.1} parent=1 // pred_check
      _
    $region23: #{tpu_custom_call.1} parent=1 // pred_check_branch
      %182 = sbr.rel (0) target = $region25
    $region24: #{tpu_custom_call.1} parent=1 // pred_region
      %s184 = ssub.s32 128, 128
      %185 = vsyncadd [#allocation5], %s184
      %s187 = sshll.u32 [#allocation4], 4
      %s188 = int_to_ptr.vmem [resolvable:$true] %s187
      %190 = dma.vmem_to_hbm [thread:$0]  %s188, 128, %s3, [#allocation5]
    $region25: #{tpu_custom_call.1} parent=1 // pred_fallthru
      _
    // Predicated region
    $region26: #{tpu_custom_call.1} parent=1 // pred_check
      _
    $region27: #{tpu_custom_call.1} parent=1 // pred_check_branch
      %192 = sbr.rel (0) target = $region29
    $region28: #{tpu_custom_call.1} parent=1 // pred_region
      %s194 = ssub.s32 128, 128
      %195 = vsyncadd [#allocation7], %s194
      %s197 = sshll.u32 [#allocation6], 4
      %s198 = int_to_ptr.vmem [resolvable:$true] %s197
      %200 = dma.vmem_to_hbm [thread:$0]  %s198, 128, %s4, [#allocation7]
    $region29: #{tpu_custom_call.1} parent=1 // pred_fallthru
      _
    // Predicated region
    $region30: #{tpu_custom_call.1} parent=1 // pred_check
      _
    $region31: #{tpu_custom_call.1} parent=1 // pred_check_branch
      %202 = sbr.rel (0) target = $region33
    $region32: #{tpu_custom_call.1} parent=1 // pred_region
      %s204 = ssub.s32 128, 128
      %205 = vsyncadd [#allocation7], %s204
      %s207 = sshll.u32 [#allocation8], 4
      %s208 = int_to_ptr.vmem [resolvable:$true] %s207
      %210 = dma.vmem_to_hbm [thread:$0]  %s208, 128, %s5, [#allocation7]
    $region33: #{tpu_custom_call.1} parent=1 // pred_fallthru
      _
    // Predicated region
    $region34: #{tpu_custom_call.1} parent=1 // pred_check
      _
    $region35: #{tpu_custom_call.1} parent=1 // pred_check_branch
      %212 = sbr.rel (0) target = $region37
    $region36: #{tpu_custom_call.1} parent=1 // pred_region
      %213 = dma.done [#allocation5], 128
    $region37: #{tpu_custom_call.1} parent=1 // pred_fallthru
      _
    // Predicated region
    $region38: #{tpu_custom_call.1} parent=1 // pred_check
      _
    $region39: #{tpu_custom_call.1} parent=1 // pred_check_branch
      %215 = sbr.rel (0) target = $region41
    $region40: #{tpu_custom_call.1} parent=1 // pred_region
      %216 = dma.done [#allocation7], 128
    $region41: #{tpu_custom_call.1} parent=1 // pred_fallthru
      _
    // Predicated region
    $region42: #{tpu_custom_call.1} parent=1 // pred_check
      _
    $region43: #{tpu_custom_call.1} parent=1 // pred_check_branch
      %218 = sbr.rel (0) target = $region45
    $region44: #{tpu_custom_call.1} parent=1 // pred_region
      %219 = dma.done [#allocation7], 128
    $region45: #{tpu_custom_call.1} parent=1 // pred_fallthru
      _
    %220 = vsyncpa [#allocation5], 1
    %221 = vsyncpa [#allocation7], 1

</llo_original>
